<compile_context>
chip_gen: v5e
topology: v5e:2x2
jax: 0.10.0
libtpu: 0.0.40
codegen_flags: <defaults>
</compile_context>

<pallas_src>
import jax
import jax.numpy as jnp
import numpy as np
from jax.experimental import pallas as pl
from jax.experimental.pallas import tpu as pltpu

NEG_SLOPE = 0.01  # nn.LeakyReLU default negative slope


def _round_up(a, m):
    return -(-a // m) * m


def _gene_grouped_indep_connectivity(num_genes: int, width_multiplier: int):
    """Deterministic re-creation of GeneGroupedIndep first/final connectivity.

    Returns (first_rows, first_cols), (final_rows, final_cols) where rows index
    output units and cols index input units (SparseLinear convention).  The nnz
    enumeration order is i = g*width_multiplier + k for both layers."""
    first_rows, first_cols, final_rows, final_cols = [], [], [], []
    for g in range(num_genes):
        for k in range(width_multiplier):
            first_rows.append(g * width_multiplier + k)   # hidden unit
            first_cols.append(g)                          # latent unit
            final_rows.append(g)                          # gene output
            final_cols.append(g * width_multiplier + k)   # hidden unit
    return (np.array(first_rows), np.array(first_cols)), (
        np.array(final_rows), np.array(final_cols))


def _vmem_capacity_bytes():
    """Physical per-core VMEM; conservative fallback = v7x's 64 MiB."""
    try:
        return int(pltpu.get_tpu_info().vmem_capacity_bytes)
    except Exception:  # pragma: no cover - older jax / non-TPU trace
        return 64 * 1024 * 1024


def _gene_tile(gene_pad: int, max_tg: int) -> int:
    """Largest multiple of 128 that divides gene_pad and is <= max_tg."""
    best = 128
    m = gene_pad // 128
    for t in range(1, max(1, max_tg // 128) + 1):
        if m % t == 0:
            best = 128 * t
    return best


# ---------------------------------------------------------------------------
# Pallas kernel: fused sparse-linear -> LeakyReLU -> sparse-linear, pure VPU.
# ---------------------------------------------------------------------------
def decoder_kernel(x_ref, w1_ref, b1_ref, w2_ref, b2_ref, o_ref):
    x = x_ref[...].astype(jnp.float32)    # (tb, tg), upcast if bf16 I/O
    wm = w1_ref.shape[0]

    # k = 0 peeled: it initializes the accumulator and absorbs the final bias
    # (saves the zero-fill plus one vadd per element vs. zeros + accumulate).
    h = x * w1_ref[0:1, :] + b1_ref[0:1, :]
    h = jnp.maximum(h, NEG_SLOPE * h)      # LeakyReLU(0.01): vmul + vmax
    y = h * w2_ref[0:1, :] + b2_ref[...]

    for k in range(1, wm):                 # static unroll; wm is small (2..8)
        h = x * w1_ref[k:k + 1, :] + b1_ref[k:k + 1, :]
        h = jnp.maximum(h, NEG_SLOPE * h)
        y = y + h * w2_ref[k:k + 1, :]
    # (The (1,tg)->(tb,tg) row broadcasts above lower to sublane broadcasts;
    #  each distinct row is used once, so there is no repeated-broadcast cost.)
    o_ref[...] = y.astype(o_ref.dtype)


def ae_decoder_forward(features, w1v, b1, w2v, b2, *, tb=None, tg=None):
    """features: (B, G) latent activations (f32 or bf16; dtype is preserved).
    w1v / b1 / w2v: (wm, G) packed nnz values where index [k, g] is the
    parameter of hidden unit g*wm+k.  b2: (G,) final-layer bias."""
    B, G = features.shape
    wm = int(w1v.shape[0])
    assert w1v.shape == (wm, G) and b1.shape == (wm, G) and w2v.shape == (wm, G)
    assert b2.shape == (G,)

    io_dtype = features.dtype
    itemsize = jnp.dtype(io_dtype).itemsize
    f32 = jnp.float32

    # --- generation-aware tile sizing ------------------------------------
    Gp = _round_up(G, 128)                      # lane-dense gene axis
    cap = _vmem_capacity_bytes()
    tile_budget = cap // 2                      # for double-buffered x + out

    if tg is None:
        tg = _gene_tile(Gp, 2048)
    assert tg % 128 == 0 and Gp % tg == 0

    if tb is None:
        tb = 512                                # ~2-4 MiB tiles at tg=1-2K
    tb = min(tb, _round_up(B, 8))
    tb_max = tile_budget // (2 * 2 * itemsize * tg)   # 2 arrays x 2 buffers
    tb = max(8, (min(tb, tb_max) // 8) * 8)
    Bp = _round_up(B, tb)

    # Guarantee >= 2 grid steps on a "parallel" axis when the problem allows
    # (software pipelining + v7x megacore sharding), by splitting the gene axis.
    if Bp // tb == 1 and Gp // tg == 1 and Gp >= 256:
        tg = _gene_tile(Gp, Gp // 2)

    # --- pad only when the shapes are ragged ------------------------------
    if Gp != G:
        w1p = jnp.zeros((wm, Gp), f32).at[:, :G].set(w1v.astype(f32))
        b1p = jnp.zeros((wm, Gp), f32).at[:, :G].set(b1.astype(f32))
        w2p = jnp.zeros((wm, Gp), f32).at[:, :G].set(w2v.astype(f32))
        b2p = jnp.zeros((1, Gp), f32).at[0, :G].set(b2.astype(f32))
    else:
        w1p = w1v.astype(f32)
        b1p = b1.astype(f32)
        w2p = w2v.astype(f32)
        b2p = b2.astype(f32).reshape(1, Gp)

    padded = (Bp != B) or (Gp != G)
    if padded:
        xp = jnp.zeros((Bp, Gp), io_dtype).at[:B, :G].set(features)
    else:
        xp = features                           # zero-copy fast path

    # Advisory cost for XLA scheduling: de-densified O(G*wm) streaming op.
    cost = pl.CostEstimate(
        flops=int(Bp) * int(Gp) * 6 * wm,
        transcendentals=0,
        bytes_accessed=(2 * int(Bp) * int(Gp) * itemsize
                        + (3 * wm + 1) * int(Gp) * 4),
    )

    # Explicit VMEM limit (default scoped limits: 16 MiB v5e / 32 MiB v6e,v7x).
    tiles_bytes = 2 * 2 * tb * tg * itemsize
    weights_bytes = 2 * (3 * wm + 1) * tg * 4
    vmem_limit = int(min(cap * 3 // 4,
                         max(32 << 20, 2 * (tiles_bytes + weights_bytes))))

    out = pl.pallas_call(
        decoder_kernel,
        out_shape=jax.ShapeDtypeStruct((Bp, Gp), io_dtype),
        grid_spec=pltpu.PrefetchScalarGridSpec(
            num_scalar_prefetch=0,
            grid=(Bp // tb, Gp // tg),
            in_specs=[
                pl.BlockSpec((tb, tg), lambda i, j: (i, j)),   # x tile
                pl.BlockSpec((wm, tg), lambda i, j: (0, j)),   # w1 nnz values
                pl.BlockSpec((wm, tg), lambda i, j: (0, j)),   # b1
                pl.BlockSpec((wm, tg), lambda i, j: (0, j)),   # w2 nnz values
                pl.BlockSpec((1, tg), lambda i, j: (0, j)),    # b2
            ],
            out_specs=pl.BlockSpec((tb, tg), lambda i, j: (i, j)),
        ),
        compiler_params=pltpu.CompilerParams(
            dimension_semantics=("parallel", "parallel"),
            vmem_limit_bytes=vmem_limit),
        cost_estimate=cost,
    )(xp, w1p, b1p, w2p, b2p)

    if padded:
        out = out[:B, :G]
    return out


def ae_decoder_reference(features, w1_dense, b1_flat, w2_dense, b2_flat):
    """Densified reference == PyTorch SparseLinear -> LeakyReLU -> SparseLinear."""
    h = features @ w1_dense.T + b1_flat
    h = jnp.where(h > 0, h, NEG_SLOPE * h)
    return h @ w2_dense.T + b2_flat


def _run_case(num_genes, width_multiplier, batch, key):
    G, wm = num_genes, width_multiplier
    hidden = G * wm
    (f_rows, f_cols), (o_rows, o_cols) = _gene_grouped_indep_connectivity(G, wm)

    k_x, k_w1, k_b1, k_w2, k_b2 = jax.random.split(key, 5)
    bound1 = 1.0 / np.sqrt(G)        # first layer fan-in = latent dim
    bound2 = 1.0 / np.sqrt(hidden)   # final layer fan-in = hidden dim

    vals1 = jax.random.uniform(k_w1, (hidden,), jnp.float32, -bound1, bound1)
    b1_flat = jax.random.uniform(k_b1, (hidden,), jnp.float32, -bound1, bound1)
    vals2 = jax.random.uniform(k_w2, (hidden,), jnp.float32, -bound2, bound2)
    b2_flat = jax.random.uniform(k_b2, (G,), jnp.float32, -bound2, bound2)

    # Packed (wm, G) layouts: index [k, g] <-> nnz i = g*wm + k.
    w1v = vals1.reshape(G, wm).T
    b1pk = b1_flat.reshape(G, wm).T
    w2v = vals2.reshape(G, wm).T

    features = jax.random.normal(k_x, (batch, G), jnp.float32)

    out = jax.block_until_ready(
        ae_decoder_forward(features, w1v, b1pk, w2v, b2_flat))

    # Densified reference (exact PyTorch SparseLinear semantics).
    w1_dense = jnp.zeros((hidden, G), jnp.float32).at[f_rows, f_cols].set(vals1)
    w2_dense = jnp.zeros((G, hidden), jnp.float32).at[o_rows, o_cols].set(vals2)
    ref = ae_decoder_reference(features, w1_dense, b1_flat, w2_dense, b2_flat)

    np.testing.assert_allclose(np.asarray(out), np.asarray(ref),
                               rtol=1e-5, atol=1e-5)


if __name__ == "__main__":
    key = jax.random.PRNGKey(0)
    k1, k2 = jax.random.split(key)
    # Ragged shapes (exercises the pad path): genes=16, width_multiplier=2, batch=8.
    _run_case(16, 2, 8, k1)
    # (8,128)-aligned shapes (pad-free path + 2-D grid): genes=256, wm=3, batch=16.
    _run_case(256, 3, 16, k2)
    # NOTE: dropout_rate / batch_norm kwargs of AEDecoder are stored but unused
    # in its forward(), so they are intentionally not implemented here.
    print("KERNEL_OK")
</pallas_src>

<mosaic_0001>
module attributes {stable_mosaic.version = 11 : i64} {
  func.func @decoder_kernel(%arg0: i32, %arg1: i32, %arg2: memref<8x128xf32, #tpu.memory_space<vmem>>, %arg3: memref<2x128xf32, #tpu.memory_space<vmem>>, %arg4: memref<2x128xf32, #tpu.memory_space<vmem>>, %arg5: memref<2x128xf32, #tpu.memory_space<vmem>>, %arg6: memref<1x128xf32, #tpu.memory_space<vmem>>, %arg7: memref<8x128xf32, #tpu.memory_space<vmem>>) attributes {dimension_semantics = [#tpu.dimension_semantics<parallel>, #tpu.dimension_semantics<parallel>], iteration_bounds = array<i64: 1, 1>, scalar_prefetch = 0 : i64, scratch_operands = 0 : i64, tpu.core_type = #tpu.core_type<tc>, window_params = [{transform_indices = @transform_0, window_bounds = array<i64: 8, 128>}, {transform_indices = @transform_1, window_bounds = array<i64: 2, 128>}, {transform_indices = @transform_2, window_bounds = array<i64: 2, 128>}, {transform_indices = @transform_3, window_bounds = array<i64: 2, 128>}, {transform_indices = @transform_4, window_bounds = array<i64: 1, 128>}, {transform_indices = @transform_5, window_bounds = array<i64: 8, 128>}]} {
    %c0 = arith.constant 0 : index
    %c0_0 = arith.constant 0 : index
    %0 = vector.load %arg2[%c0, %c0_0] : memref<8x128xf32, #tpu.memory_space<vmem>>, vector<8x128xf32>
    %c0_1 = arith.constant 0 : index
    %c0_2 = arith.constant 0 : index
    %1 = vector.load %arg3[%c0_1, %c0_2] : memref<2x128xf32, #tpu.memory_space<vmem>>, vector<1x128xf32>
    %2 = vector.broadcast %1 : vector<1x128xf32> to vector<8x128xf32>
    %3 = arith.mulf %0, %2 : vector<8x128xf32>
    %c0_3 = arith.constant 0 : index
    %c0_4 = arith.constant 0 : index
    %4 = vector.load %arg4[%c0_3, %c0_4] : memref<2x128xf32, #tpu.memory_space<vmem>>, vector<1x128xf32>
    %5 = vector.broadcast %4 : vector<1x128xf32> to vector<8x128xf32>
    %6 = arith.addf %3, %5 : vector<8x128xf32>
    %cst = arith.constant 0.00999999977 : f32
    %7 = vector.broadcast %cst : f32 to vector<8x128xf32>
    %8 = arith.mulf %7, %6 : vector<8x128xf32>
    %9 = arith.maximumf %6, %8 : vector<8x128xf32>
    %c0_5 = arith.constant 0 : index
    %c0_6 = arith.constant 0 : index
    %10 = vector.load %arg5[%c0_5, %c0_6] : memref<2x128xf32, #tpu.memory_space<vmem>>, vector<1x128xf32>
    %11 = vector.broadcast %10 : vector<1x128xf32> to vector<8x128xf32>
    %12 = arith.mulf %9, %11 : vector<8x128xf32>
    %c0_7 = arith.constant 0 : index
    %c0_8 = arith.constant 0 : index
    %13 = vector.load %arg6[%c0_7, %c0_8] : memref<1x128xf32, #tpu.memory_space<vmem>>, vector<1x128xf32>
    %14 = vector.broadcast %13 : vector<1x128xf32> to vector<8x128xf32>
    %15 = arith.addf %12, %14 : vector<8x128xf32>
    %c1 = arith.constant 1 : index
    %c0_9 = arith.constant 0 : index
    %16 = vector.load %arg3[%c1, %c0_9] : memref<2x128xf32, #tpu.memory_space<vmem>>, vector<1x128xf32>
    %17 = vector.broadcast %16 : vector<1x128xf32> to vector<8x128xf32>
    %18 = arith.mulf %0, %17 : vector<8x128xf32>
    %c1_10 = arith.constant 1 : index
    %c0_11 = arith.constant 0 : index
    %19 = vector.load %arg4[%c1_10, %c0_11] : memref<2x128xf32, #tpu.memory_space<vmem>>, vector<1x128xf32>
    %20 = vector.broadcast %19 : vector<1x128xf32> to vector<8x128xf32>
    %21 = arith.addf %18, %20 : vector<8x128xf32>
    %cst_12 = arith.constant 0.00999999977 : f32
    %22 = vector.broadcast %cst_12 : f32 to vector<8x128xf32>
    %23 = arith.mulf %22, %21 : vector<8x128xf32>
    %24 = arith.maximumf %21, %23 : vector<8x128xf32>
    %c1_13 = arith.constant 1 : index
    %c0_14 = arith.constant 0 : index
    %25 = vector.load %arg5[%c1_13, %c0_14] : memref<2x128xf32, #tpu.memory_space<vmem>>, vector<1x128xf32>
    %26 = vector.broadcast %25 : vector<1x128xf32> to vector<8x128xf32>
    %27 = arith.mulf %24, %26 : vector<8x128xf32>
    %28 = arith.addf %15, %27 : vector<8x128xf32>
    %c0_15 = arith.constant 0 : index
    %c0_16 = arith.constant 0 : index
    %29 = vector.load %arg7[%c0_15, %c0_16] : memref<8x128xf32, #tpu.memory_space<vmem>>, vector<8x128xf32>
    tpu.vector_store %arg7[%c0_15, %c0_16], %28 {strides = array<i32>} : memref<8x128xf32, #tpu.memory_space<vmem>>, vector<8x128xf32>,
    return
  }
  func.func @transform_0(%arg0: i32, %arg1: i32) -> (i32, i32) {
    %c0_i32 = arith.constant 0 : i32
    return %arg0, %arg1 : i32, i32
  }
  func.func @transform_1(%arg0: i32, %arg1: i32) -> (i32, i32) {
    %c0_i32 = arith.constant 0 : i32
    %c0_i32_0 = arith.constant 0 : i32
    return %c0_i32, %arg1 : i32, i32
  }
  func.func @transform_2(%arg0: i32, %arg1: i32) -> (i32, i32) {
    %c0_i32 = arith.constant 0 : i32
    %c0_i32_0 = arith.constant 0 : i32
    return %c0_i32, %arg1 : i32, i32
  }
  func.func @transform_3(%arg0: i32, %arg1: i32) -> (i32, i32) {
    %c0_i32 = arith.constant 0 : i32
    %c0_i32_0 = arith.constant 0 : i32
    return %c0_i32, %arg1 : i32, i32
  }
  func.func @transform_4(%arg0: i32, %arg1: i32) -> (i32, i32) {
    %c0_i32 = arith.constant 0 : i32
    %c0_i32_0 = arith.constant 0 : i32
    return %c0_i32, %arg1 : i32, i32
  }
  func.func @transform_5(%arg0: i32, %arg1: i32) -> (i32, i32) {
    %c0_i32 = arith.constant 0 : i32
    return %arg0, %arg1 : i32, i32
  }
}

</mosaic_0001>

<llo_original>
// kernel: tpu_custom_call.1
$region0: #{tpu_custom_call.1}
  #allocation0 [shape = 'u32[]', space=smem, size = 0x4, offset = 0x4, fixed_abs, tag = 'smem constant byte address 0x4 - core index']
  #allocation1 [shape = 'u32[72,128]{1,0:T(1,128)}', space=vmem, size = 0x9000, scoped, tag = 'internal scratch']
  %s0 = inlined_call_operand.hbm [shape: f32[8,128], index: 0, kind: input, shape index: {}]
  %s1 = inlined_call_operand.hbm [shape: f32[2,128], index: 1, kind: input, shape index: {}]
  %s2 = inlined_call_operand.hbm [shape: f32[2,128], index: 2, kind: input, shape index: {}]
  %s3 = inlined_call_operand.vmem [shape: f32[2,128], index: 3, kind: input, shape index: {}]
  %s4 = inlined_call_operand.vmem [shape: f32[1,128], index: 4, kind: input, shape index: {}]
  %s5 = inlined_call_operand.hbm [shape: f32[8,128], index: 5, kind: output, shape index: {}]
  %s6 = sld [smem:[#allocation0]]
  $region42: #{tpu_custom_call.1} parent=0
    _
  %s8 = ssub.s32 1, %s6
  %s9 = scalar_select 0, %s8, %s6
  $region1: #{tpu_custom_call.1} parent=0
    #allocation2 [shape = 'u8[4096]{0}', space=vmem, size = 0x1000, scoped, tag = 'input window, operand 0, single buffered']
    #allocation3 [shape = 's32[1]{0}', space=sflag, size = 0x4, scoped, tag = 'scoped memory for tpu_custom_call.1']
    #allocation4 [shape = 's32[1]{0}', space=sflag, size = 0x4, scoped, tag = 'scoped memory for tpu_custom_call.1']
    #allocation5 [shape = 'u8[1024]{0}', space=vmem, size = 0x400, scoped, tag = 'input window, operand 1, single buffered']
    #allocation6 [shape = 's32[1]{0}', space=sflag, size = 0x4, scoped, tag = 'scoped memory for tpu_custom_call.1']
    #allocation7 [shape = 'u8[1024]{0}', space=vmem, size = 0x400, scoped, tag = 'input window, operand 2, single buffered']
    #allocation8 [shape = 'u8[4096]{0}', space=vmem, size = 0x1000, scoped, tag = 'output window, operand 0, single buffered']
    %10 = vsyncpa [#allocation3], 0
    %11 = vsyncpa [#allocation6], 0
    %12 = vsyncpa [#allocation4], 0
    // Predicated region
    $region2: #{tpu_custom_call.1} parent=1 // pred_check
      _
    $region3: #{tpu_custom_call.1} parent=1 // pred_check_branch
      %14 = sbr.rel (0) target = $region5
    $region4: #{tpu_custom_call.1} parent=1 // pred_region
      %16 = vsyncadd [#allocation3], 0
      %s18 = sshll.u32 %s0, 4
      %s19 = int_to_ptr.hbm [resolvable:$true] %s18
      %s20 = sshll.u32 [#allocation2], 4
      %s21 = int_to_ptr.vmem [resolvable:$true] %s20
      %23 = dma.hbm_to_vmem [thread:$0]  %s19, 128, %s21, [#allocation3]
    $region5: #{tpu_custom_call.1} parent=1 // pred_fallthru
      _
    // Predicated region
    $region6: #{tpu_custom_call.1} parent=1 // pred_check
      _
    $region7: #{tpu_custom_call.1} parent=1 // pred_check_branch
      %25 = sbr.rel (0) target = $region9
    $region8: #{tpu_custom_call.1} parent=1 // pred_region
      %27 = vsyncadd [#allocation6], 0
      %s29 = sshll.u32 %s1, 4
      %s30 = int_to_ptr.hbm [resolvable:$true] %s29
      %s31 = sshll.u32 [#allocation5], 4
      %s32 = int_to_ptr.vmem [resolvable:$true] %s31
      %34 = dma.hbm_to_vmem [thread:$0]  %s30, 32, %s32, [#allocation6]
    $region9: #{tpu_custom_call.1} parent=1 // pred_fallthru
      _
    // Predicated region
    $region10: #{tpu_custom_call.1} parent=1 // pred_check
      _
    $region11: #{tpu_custom_call.1} parent=1 // pred_check_branch
      %36 = sbr.rel (0) target = $region13
    $region12: #{tpu_custom_call.1} parent=1 // pred_region
      %38 = vsyncadd [#allocation6], 0
      %s40 = sshll.u32 %s2, 4
      %s41 = int_to_ptr.hbm [resolvable:$true] %s40
      %s42 = sshll.u32 [#allocation7], 4
      %s43 = int_to_ptr.vmem [resolvable:$true] %s42
      %45 = dma.hbm_to_vmem [thread:$0]  %s41, 32, %s43, [#allocation6]
    $region13: #{tpu_custom_call.1} parent=1 // pred_fallthru
      _
    // Predicated region
    $region14: #{tpu_custom_call.1} parent=1 // pred_check
      _
    $region15: #{tpu_custom_call.1} parent=1 // pred_check_branch
      %47 = sbr.rel (0) target = $region17
    $region16: #{tpu_custom_call.1} parent=1 // pred_region
      _
    $region17: #{tpu_custom_call.1} parent=1 // pred_fallthru
      _
    // Predicated region
    $region18: #{tpu_custom_call.1} parent=1 // pred_check
      _
    $region19: #{tpu_custom_call.1} parent=1 // pred_check_branch
      %49 = sbr.rel (0) target = $region21
    $region20: #{tpu_custom_call.1} parent=1 // pred_region
      _
    $region21: #{tpu_custom_call.1} parent=1 // pred_fallthru
      _
    // Predicated region
    $region22: #{tpu_custom_call.1} parent=1 // pred_check
      _
    $region23: #{tpu_custom_call.1} parent=1 // pred_check_branch
      %51 = sbr.rel (0) target = $region25
    $region24: #{tpu_custom_call.1} parent=1 // pred_region
      %53 = dma.done [#allocation3], 128
    $region25: #{tpu_custom_call.1} parent=1 // pred_fallthru
      _
    // Predicated region
    $region26: #{tpu_custom_call.1} parent=1 // pred_check
      _
    $region27: #{tpu_custom_call.1} parent=1 // pred_check_branch
      %55 = sbr.rel (0) target = $region29
    $region28: #{tpu_custom_call.1} parent=1 // pred_region
      %57 = dma.done [#allocation6], 32
    $region29: #{tpu_custom_call.1} parent=1 // pred_fallthru
      _
    // Predicated region
    $region30: #{tpu_custom_call.1} parent=1 // pred_check
      _
    $region31: #{tpu_custom_call.1} parent=1 // pred_check_branch
      %59 = sbr.rel (0) target = $region33
    $region32: #{tpu_custom_call.1} parent=1 // pred_region
      %61 = dma.done [#allocation6], 32
    $region33: #{tpu_custom_call.1} parent=1 // pred_fallthru
      _
    %v62 = vld [vmem:[#allocation2] sm:$0xff]
    %v63 = vld [vmem:[#allocation5] sm:$0x1]
    %v64 = vperm.slane %v63, 0
    %v65 = vmul.f32 %v62, %v64
    %v66 = vld [vmem:[#allocation7] sm:$0x1]
    %v67 = vperm.slane %v66, 0
    %v68 = vadd.f32 %v65, %v67
    %v69 = vmul.f32 %v68, 0.01
    %v70 = vmax.f32 %v68, %v69
    %v71 = vld [vmem:[%s3] sm:$0x1]
    %v72 = vperm.slane %v71, 0
    %v73 = vmul.f32 %v70, %v72
    %v74 = vld [vmem:[%s4] sm:$0x1]
    %v76 = vperm.slane %v74, 0
    %v78 = vadd.f32 %v73, %v76
    %v79 = vld [vmem:[#allocation5 + $0x1] sm:$0x1]
    %v80 = vperm.slane %v79, 0
    %v81 = vmul.f32 %v62, %v80
    %v82 = vld [vmem:[#allocation7 + $0x1] sm:$0x1]
    %v83 = vperm.slane %v82, 0
    %v84 = vadd.f32 %v81, %v83
    %v85 = vmul.f32 %v84, 0.01
    %v86 = vmax.f32 %v84, %v85
    %v87 = vld [vmem:[%s3 + $0x1] sm:$0x1]
    %v88 = vperm.slane %v87, 0
    %v89 = vmul.f32 %v86, %v88
    %v90 = vadd.f32 %v78, %v89
    %91 = vst [vmem:[#allocation8] sm:$0xff] %v90
    // Predicated region
    $region34: #{tpu_custom_call.1} parent=1 // pred_check
      _
    $region35: #{tpu_custom_call.1} parent=1 // pred_check_branch
      %93 = sbr.rel (0) target = $region37
    $region36: #{tpu_custom_call.1} parent=1 // pred_region
      %95 = vsyncadd [#allocation4], 0
      %s97 = sshll.u32 [#allocation8], 4
      %s98 = int_to_ptr.vmem [resolvable:$true] %s97
      %s99 = sshll.u32 %s5, 4
      %s100 = int_to_ptr.hbm [resolvable:$true] %s99
      %102 = dma.vmem_to_hbm [thread:$0]  %s98, 128, %s100, [#allocation4]
    $region37: #{tpu_custom_call.1} parent=1 // pred_fallthru
      _
    // Predicated region
    $region38: #{tpu_custom_call.1} parent=1 // pred_check
      _
    $region39: #{tpu_custom_call.1} parent=1 // pred_check_branch
      %104 = sbr.rel (0) target = $region41
    $region40: #{tpu_custom_call.1} parent=1 // pred_region
      %106 = dma.done [#allocation4], 128
    $region41: #{tpu_custom_call.1} parent=1 // pred_fallthru
      _
    %107 = vsyncpa [#allocation3], 1
    %108 = vsyncpa [#allocation6], 1
    %109 = vsyncpa [#allocation4], 1

</llo_original>
